<compile_context>
chip_gen: v6e
topology: v6e:2x2x1
jax: 0.10.0
libtpu: 0.0.40
codegen_flags: <defaults>
</compile_context>

<pallas_src>
import jax
import jax.numpy as jnp
from jax.experimental import pallas as pl
from jax.experimental.pallas import tpu as pltpu


def _cdiv(a, b):
    return (a + b - 1) // b


def _round_up(x, m):
    return ((x + m - 1) // m) * m


# Sublane packing per element size: rows of the second-to-minor block dim must
# be a multiple of this (or the full array extent).
_SUBLANE_PACK = {4: 8, 2: 16, 1: 32}


def _patch_embed_kernel(x_ref, w_ref, b_ref, o_ref):
    # One M-tile: (tm, K) @ (K, Npad) on the MXU with f32 accumulation,
    # f32 bias add, cast to the output dtype on store (full-lane vst, Npad%128==0).
    acc = jnp.dot(x_ref[...], w_ref[...], preferred_element_type=jnp.float32)
    o_ref[...] = (acc + b_ref[...]).astype(o_ref.dtype)


def patch_embed_forward(x, weight, bias, patch_size, *,
                        compute_dtype=None, out_dtype=None,
                        output_format="NCHW"):
    """
    x      : (B, C, H, W)             NCHW, like the PyTorch module input
    weight : (embed_dim, C, p, p)     PyTorch Conv2d (OIHW) weight layout
    bias   : (embed_dim,)
    compute_dtype : optional dtype (e.g. jnp.bfloat16) for the matmul inputs;
                    accumulation / bias add stay in f32.
    out_dtype     : output storage dtype; defaults to compute_dtype (or x.dtype).
    output_format : "NCHW" (module-exact, extra HBM transpose pass),
                    "NHWC" (B, Hp, Wp, E)  -- lane-dense, free,
                    "NLC"  (B, Hp*Wp, E)   -- lane-dense, free, what StyTR consumes.
    """
    assert output_format in ("NCHW", "NHWC", "NLC")
    B, C, H, W = x.shape
    p = patch_size
    E = weight.shape[0]
    Hp, Wp = H // p, W // p
    M, K, N = B * Hp * Wp, C * p * p, E

    if out_dtype is None:
        out_dtype = compute_dtype if compute_dtype is not None else x.dtype

    # --- glue: cast first (halves transpose bytes on bf16 path), then im2col ---
    x_c = x.astype(compute_dtype) if compute_dtype is not None else x
    patches = x_c.reshape(B, C, Hp, p, Wp, p)
    patches = jnp.transpose(patches, (0, 2, 4, 1, 3, 5)).reshape(M, K)

    # --- glue: flatten conv weight to (K, N), matching (C, ph, pw) row order ---
    w2d = weight.reshape(E, K).T
    if compute_dtype is not None:
        w2d = w2d.astype(compute_dtype)
    b_row = bias.reshape(1, N).astype(jnp.float32)

    # --- lane-dense output: pad embed dim to a multiple of 128 ---
    Npad = _round_up(N, 128)
    if Npad != N:
        w2d = jnp.pad(w2d, ((0, 0), (0, Npad - N)))
        b_row = jnp.pad(b_row, ((0, 0), (0, Npad - N)))

    # --- M tiling: big tiles (amortize ~0.35us/step), >=2 even grid steps so
    #     both v7x TensorCores get work, rows aligned to the sublane pack of
    #     both the input and output dtypes ---
    row_align = max(_SUBLANE_PACK.get(jnp.dtype(patches.dtype).itemsize, 8),
                    _SUBLANE_PACK.get(jnp.dtype(out_dtype).itemsize, 8))
    MAX_TM = 2048
    steps = max(2, _cdiv(M, MAX_TM))
    steps += steps % 2                       # even step count -> balanced megacore split
    tm = max(row_align, _round_up(_cdiv(M, steps), row_align))
    Mpad = _round_up(M, tm)
    if Mpad != M:
        patches = jnp.pad(patches, ((0, Mpad - M), (0, 0)))
    grid = (Mpad // tm,)

    in_sz = patches.dtype.itemsize
    out_sz = jnp.dtype(out_dtype).itemsize
    # Double-buffered x/out tiles + (double-buffered) resident weight/bias + headroom.
    vmem_bytes = (2 * (tm * K * in_sz + tm * Npad * out_sz)
                  + 2 * (K * Npad * in_sz + Npad * 4))
    vmem_bytes = int(min(vmem_bytes + (4 << 20), 48 << 20))  # leave headroom on v7x 64 MiB

    cost = pl.CostEstimate(
        flops=2 * Mpad * K * Npad,
        transcendentals=0,
        bytes_accessed=(Mpad * K + K * Npad) * in_sz + Npad * 4 + Mpad * Npad * out_sz,
    )

    out_padded = pl.pallas_call(
        _patch_embed_kernel,
        out_shape=jax.ShapeDtypeStruct((Mpad, Npad), out_dtype),
        grid_spec=pltpu.PrefetchScalarGridSpec(
            num_scalar_prefetch=0,
            grid=grid,
            in_specs=[
                pl.BlockSpec((tm, K), lambda i: (i, 0)),     # M-tile of patches
                pl.BlockSpec((K, Npad), lambda i: (0, 0)),   # weight: VMEM-resident
                pl.BlockSpec((1, Npad), lambda i: (0, 0)),   # bias:   VMEM-resident
            ],
            out_specs=pl.BlockSpec((tm, Npad), lambda i: (i, 0)),
        ),
        compiler_params=pltpu.CompilerParams(
            dimension_semantics=("parallel",),
            vmem_limit_bytes=vmem_bytes,
        ),
        cost_estimate=cost,
    )(patches, w2d, b_row)

    # --- strip padding (no-op when E and M are already aligned) ---
    out2d = out_padded
    if Mpad != M or Npad != N:
        out2d = out2d[:M, :N]

    if output_format == "NLC":
        return out2d.reshape(B, Hp * Wp, N)          # lane-dense, free reshape
    if output_format == "NHWC":
        return out2d.reshape(B, Hp, Wp, N)           # lane-dense, free reshape
    # "NCHW": module-exact nn.Conv2d layout; one extra HBM pass over the output.
    out = out2d.reshape(B, Hp, Wp, N)
    return jnp.transpose(out, (0, 3, 1, 2))


if __name__ == "__main__":
    # Small, module-consistent shapes: in_chans=3 (module asserts it), patch=8.
    B, C, H, W = 2, 3, 64, 64
    patch_size = 8
    embed_dim = 32          # padded to 128 lanes inside the kernel

    key = jax.random.PRNGKey(0)
    kx, kw, kb = jax.random.split(key, 3)

    x = jax.random.normal(kx, (B, C, H, W), dtype=jnp.float32)
    weight = jax.random.normal(
        kw, (embed_dim, C, patch_size, patch_size), dtype=jnp.float32) * 0.02
    bias = jax.random.normal(kb, (embed_dim,), dtype=jnp.float32) * 0.02

    # Reference: XLA convolution with identical semantics to nn.Conv2d.
    ref = jax.lax.conv_general_dilated(
        x, weight, window_strides=(patch_size, patch_size), padding="VALID",
        dimension_numbers=("NCHW", "OIHW", "NCHW"),
    ) + bias.reshape(1, embed_dim, 1, 1)

    # 1) f32, module-exact NCHW layout (default).
    out_nchw = patch_embed_forward(x, weight, bias, patch_size)
    out_nchw = jax.block_until_ready(out_nchw)
    assert out_nchw.shape == (B, embed_dim, H // patch_size, W // patch_size)
    assert jnp.allclose(out_nchw, ref, atol=1e-4, rtol=1e-4)

    # 2) f32, lane-dense fast path (no output transpose; what StyTR consumes).
    out_nlc = patch_embed_forward(x, weight, bias, patch_size, output_format="NLC")
    out_nlc = jax.block_until_ready(out_nlc)
    ref_nlc = jnp.transpose(ref, (0, 2, 3, 1)).reshape(B, -1, embed_dim)
    assert out_nlc.shape == ref_nlc.shape
    assert jnp.allclose(out_nlc, ref_nlc, atol=1e-4, rtol=1e-4)

    # 3) bf16 compute + bf16 store (MXU-native, halves output HBM bytes), f32 accumulation.
    out_bf16 = patch_embed_forward(x, weight, bias, patch_size,
                                   compute_dtype=jnp.bfloat16,
                                   output_format="NLC")
    out_bf16 = jax.block_until_ready(out_bf16)
    assert out_bf16.dtype == jnp.bfloat16
    assert jnp.allclose(out_bf16.astype(jnp.float32), ref_nlc, atol=5e-2, rtol=5e-2)

    print("KERNEL_OK")
</pallas_src>

<mosaic_0001>
module attributes {stable_mosaic.version = 11 : i64} {
  func.func @_patch_embed_kernel(%arg0: i32, %arg1: memref<64x192xf32, #tpu.memory_space<vmem>>, %arg2: memref<192x128xf32, #tpu.memory_space<vmem>>, %arg3: memref<1x128xf32, #tpu.memory_space<vmem>>, %arg4: memref<64x128xf32, #tpu.memory_space<vmem>>) attributes {dimension_semantics = [#tpu.dimension_semantics<parallel>], iteration_bounds = array<i64: 2>, scalar_prefetch = 0 : i64, scratch_operands = 0 : i64, tpu.core_type = #tpu.core_type<tc>, window_params = [{transform_indices = @transform_0, window_bounds = array<i64: 64, 192>}, {pipeline_mode = #tpu.pipeline_mode<synchronous>, transform_indices = @transform_1, window_bounds = array<i64: 192, 128>}, {pipeline_mode = #tpu.pipeline_mode<synchronous>, transform_indices = @transform_2, window_bounds = array<i64: 1, 128>}, {transform_indices = @transform_3, window_bounds = array<i64: 64, 128>}]} {
    %c0 = arith.constant 0 : index
    %c0_0 = arith.constant 0 : index
    %0 = vector.load %arg1[%c0, %c0_0] : memref<64x192xf32, #tpu.memory_space<vmem>>, vector<64x192xf32>
    %c0_1 = arith.constant 0 : index
    %c0_2 = arith.constant 0 : index
    %1 = vector.load %arg2[%c0_1, %c0_2] : memref<192x128xf32, #tpu.memory_space<vmem>>, vector<192x128xf32>
    %cst = arith.constant dense<0.000000e+00> : vector<64x128xf32>
    %2 = tpu.matmul %0, %1, %cst {dimension_numbers = #tpu.dot_dimension_numbers<[1], [0], [0], [1], [0, 0, 1, 1], [], []>} : vector<64x192xf32>, vector<192x128xf32>, vector<64x128xf32> -> vector<64x128xf32>
    %c0_3 = arith.constant 0 : index
    %c0_4 = arith.constant 0 : index
    %3 = vector.load %arg3[%c0_3, %c0_4] : memref<1x128xf32, #tpu.memory_space<vmem>>, vector<1x128xf32>
    %4 = vector.broadcast %3 : vector<1x128xf32> to vector<64x128xf32>
    %5 = arith.addf %2, %4 : vector<64x128xf32>
    %c0_5 = arith.constant 0 : index
    %c0_6 = arith.constant 0 : index
    %6 = vector.load %arg4[%c0_5, %c0_6] : memref<64x128xf32, #tpu.memory_space<vmem>>, vector<64x128xf32>
    tpu.vector_store %arg4[%c0_5, %c0_6], %5 {strides = array<i32>} : memref<64x128xf32, #tpu.memory_space<vmem>>, vector<64x128xf32>,
    return
  }
  func.func @transform_0(%arg0: i32) -> (i32, i32) {
    %c0_i32 = arith.constant 0 : i32
    %c0_i32_0 = arith.constant 0 : i32
    return %arg0, %c0_i32 : i32, i32
  }
  func.func @transform_1(%arg0: i32) -> (i32, i32) {
    %c0_i32 = arith.constant 0 : i32
    %c0_i32_0 = arith.constant 0 : i32
    %c0_i32_1 = arith.constant 0 : i32
    return %c0_i32, %c0_i32_0 : i32, i32
  }
  func.func @transform_2(%arg0: i32) -> (i32, i32) {
    %c0_i32 = arith.constant 0 : i32
    %c0_i32_0 = arith.constant 0 : i32
    %c0_i32_1 = arith.constant 0 : i32
    return %c0_i32, %c0_i32_0 : i32, i32
  }
  func.func @transform_3(%arg0: i32) -> (i32, i32) {
    %c0_i32 = arith.constant 0 : i32
    %c0_i32_0 = arith.constant 0 : i32
    return %arg0, %c0_i32 : i32, i32
  }
}

</mosaic_0001>

<llo_original>
// kernel: tpu_custom_call.1
$region0: #{tpu_custom_call.1}
  #allocation0 [shape = 'u32[]', space=smem, size = 0x4, offset = 0x4, fixed_abs, tag = 'smem constant byte address 0x4 - core index']
  #allocation1 [shape = 'u32[144,128]{1,0:T(1,128)}', space=vmem, size = 0x12000, scoped, tag = 'internal scratch']
  %s0 = inlined_call_operand.vmem [shape: f32[128,192], index: 0, kind: input, shape index: {}]
  %s1 = inlined_call_operand.vmem [shape: f32[192,128], index: 1, kind: input, shape index: {}]
  %s2 = inlined_call_operand.vmem [shape: f32[1,128], index: 2, kind: input, shape index: {}]
  %s3 = inlined_call_operand.hbm [shape: f32[128,128], index: 3, kind: output, shape index: {}]
  %s4 = sld [smem:[#allocation0]]
  $region45: #{tpu_custom_call.1} parent=0
    _
  %s6 = ssub.s32 1, %s4
  %s7 = scalar_select 0, %s6, %s4
  $region1: #{tpu_custom_call.1} parent=0
    #allocation2 [shape = 'u8[65536]{0}', space=vmem, size = 0x10000, scoped, tag = 'output window, operand 0']
    #allocation3 [shape = 's32[2]{0}', space=sflag, size = 0x8, scoped, tag = 'scoped memory for tpu_custom_call.1']
    %8 = vsyncpa [#allocation3], 0
    %s9 = scalar_lea.sflag [#allocation3], 1
    %10 = vsyncpa %s9, 0
    loop: start=0, step=1, limit=4
    $region2: #{tpu_custom_call.1} parent=1 // loop_pre_header
      _
    $region3: #{tpu_custom_call.1} parent=1 // loop_header
      %s12 = sphi 0, %s16
      %p13 = scmp.ge.s32.totalorder %s12, 4
      %s22 = sphi 0, %s24
      %s25 = sphi 0, %s22
      %s26 = sphi 0, %s25
      %s42 = sphi 0, %s26
      %s46 = sphi 0, %s46
      %s48 = sphi 0, %s46
      %s49 = sphi 0, %s48
      %s63 = sphi 0, %s49
      %s67 = sphi 0, %s67
      %s69 = sphi 0, %s67
      %s70 = sphi 0, %s69
      %s84 = sphi 0, %s70
      %s90 = sphi 0, %s92
      %s93 = sphi 0, %s90
      %s94 = sphi 0, %s93
      %s110 = sphi 0, %s94
    $region4: #{tpu_custom_call.1} parent=1 // loop_header_branch
      %15 = sbr.rel (%p13) target = $region8
    $region5: #{tpu_custom_call.1} parent=1 // loop_body
      %s17 = ssub.s32 %s12, 1
      %s18 = ssub.s32 %s12, 2
      %s19 = sadd.s32 %s12, 1
      %s20 = ssub.s32 %s12, %s19
      %p21 = scmp.eq.s32.totalorder %s20, 0
      %s23 = sadd.s32 %s22, 1
      %s24 = scalar_select %p21, %s22, %s23
      %p27 = pneg %p21
      %p28 = scmp.eq.s32.totalorder %s12, 1
      %p29 = por %p27, %p28
      %p30 = scmp.ne.s32.totalorder %s22, %s25
      %p31 = scmp.eq.s32.totalorder %s12, 0
      %p32 = por %p30, %p31
      %p33 = scmp.ne.s32.totalorder %s22, %s25
      %p34 = scmp.eq.s32.totalorder %s17, 1
      %p35 = por %p33, %p34
      %p36 = scmp.ne.s32.totalorder %s25, %s26
      %p37 = scmp.eq.s32.totalorder %s17, 0
      %p38 = por %p36, %p37
      %p39 = scmp.ne.s32.totalorder %s25, %s26
      %p40 = scmp.eq.s32.totalorder %s18, 1
      %p41 = por %p39, %p40
      %p43 = scmp.ne.s32.totalorder %s26, %s42
      %p44 = scmp.eq.s32.totalorder %s18, 0
      %p45 = por %p43, %p44
      %s47 = sadd.s32 %s46, 1
      %p50 = scmp.eq.s32.totalorder %s12, 1
      %p51 = scmp.ne.s32.totalorder %s46, %s48
      %p52 = scmp.eq.s32.totalorder %s12, 0
      %p53 = por %p51, %p52
      %p54 = scmp.ne.s32.totalorder %s46, %s48
      %p55 = scmp.eq.s32.totalorder %s17, 1
      %p56 = por %p54, %p55
      %p57 = scmp.ne.s32.totalorder %s48, %s49
      %p58 = scmp.eq.s32.totalorder %s17, 0
      %p59 = por %p57, %p58
      %p60 = scmp.ne.s32.totalorder %s48, %s49
      %p61 = scmp.eq.s32.totalorder %s18, 1
      %p62 = por %p60, %p61
      %p64 = scmp.ne.s32.totalorder %s49, %s63
      %p65 = scmp.eq.s32.totalorder %s18, 0
      %p66 = por %p64, %p65
      %s68 = sadd.s32 %s67, 1
      %p71 = scmp.eq.s32.totalorder %s12, 1
      %p72 = scmp.ne.s32.totalorder %s67, %s69
      %p73 = scmp.eq.s32.totalorder %s12, 0
      %p74 = por %p72, %p73
      %p75 = scmp.ne.s32.totalorder %s67, %s69
      %p76 = scmp.eq.s32.totalorder %s17, 1
      %p77 = por %p75, %p76
      %p78 = scmp.ne.s32.totalorder %s69, %s70
      %p79 = scmp.eq.s32.totalorder %s17, 0
      %p80 = por %p78, %p79
      %p81 = scmp.ne.s32.totalorder %s69, %s70
      %p82 = scmp.eq.s32.totalorder %s18, 1
      %p83 = por %p81, %p82
      %p85 = scmp.ne.s32.totalorder %s70, %s84
      %p86 = scmp.eq.s32.totalorder %s18, 0
      %p87 = por %p85, %p86
      %s88 = ssub.s32 %s12, %s19
      %p89 = scmp.eq.s32.totalorder %s88, 0
      %s91 = sadd.s32 %s90, 1
      %s92 = scalar_select %p89, %s90, %s91
      %p95 = pneg %p89
      %p96 = scmp.eq.s32.totalorder %s12, 1
      %p97 = por %p95, %p96
      %p98 = scmp.ne.s32.totalorder %s90, %s93
      %p99 = scmp.eq.s32.totalorder %s12, 0
      %p100 = por %p98, %p99
      %p101 = scmp.ne.s32.totalorder %s90, %s93
      %p102 = scmp.eq.s32.totalorder %s17, 1
      %p103 = por %p101, %p102
      %p104 = scmp.ne.s32.totalorder %s93, %s94
      %p105 = scmp.eq.s32.totalorder %s17, 0
      %p106 = por %p104, %p105
      %p107 = scmp.ne.s32.totalorder %s93, %s94
      %p108 = scmp.eq.s32.totalorder %s18, 1
      %p109 = por %p107, %p108
      %p111 = scmp.ne.s32.totalorder %s94, %s110
      %p112 = scmp.eq.s32.totalorder %s18, 0
      %p113 = por %p111, %p112
      %p114 = scmp.le.s32.totalorder 1, %s12
      %p115 = scmp.lt.s32.totalorder %s12, 3
      %p116 = pnand %p114, %p115
      %p117 = pneg %p116
      // Predicated region
      $region9: #{tpu_custom_call.1} parent=5 // pred_check
        _
      $region10: #{tpu_custom_call.1} parent=5 // pred_check_branch
        %119 = sbr.rel (%p116) target = $region12
      $region11: #{tpu_custom_call.1} parent=5 // pred_region
        %s120 = ssub.s32 %s12, 1
        // Predicated region
        $region13: #{tpu_custom_call.1} parent=11 // pred_check
          %p121 = pneg %p59
        $region14: #{tpu_custom_call.1} parent=11 // pred_check_branch
          %123 = sbr.rel (%p121) target = $region16
        $region15: #{tpu_custom_call.1} parent=11 // pred_region
          _
        $region16: #{tpu_custom_call.1} parent=11 // pred_fallthru
          _
        // Predicated region
        $region17: #{tpu_custom_call.1} parent=11 // pred_check
          %p124 = pneg %p80
        $region18: #{tpu_custom_call.1} parent=11 // pred_check_branch
          %126 = sbr.rel (%p124) target = $region20
        $region19: #{tpu_custom_call.1} parent=11 // pred_region
          _
        $region20: #{tpu_custom_call.1} parent=11 // pred_fallthru
          _
      $region12: #{tpu_custom_call.1} parent=5 // pred_fallthru
        _
      %p127 = scmp.lt.s32.totalorder %s12, 2
      // Predicated region
      $region21: #{tpu_custom_call.1} parent=5 // pred_check
        %p128 = pneg %p127
      $region22: #{tpu_custom_call.1} parent=5 // pred_check_branch
        %130 = sbr.rel (%p128) target = $region24
      $region23: #{tpu_custom_call.1} parent=5 // pred_region
        // Predicated region
        $region25: #{tpu_custom_call.1} parent=23 // pred_check
          %p131 = pneg %p32
        $region26: #{tpu_custom_call.1} parent=23 // pred_check_branch
          %133 = sbr.rel (%p131) target = $region28
        $region27: #{tpu_custom_call.1} parent=23 // pred_region
          %s134 = smul.u32 8, %s12
          %p135 = scmp.lt.s32.totalorder %s134, 15
          %s136 = scalar_select %p135, %s134, 15
          %s137 = smul.addr %s136, 2
          %s138 = smul.addr %s137, 8
          %s139 = scalar_lea.vmem %s0, %s138
          %s140 = smul.u32 8, %s12
        $region28: #{tpu_custom_call.1} parent=23 // pred_fallthru
          _
      $region24: #{tpu_custom_call.1} parent=5 // pred_fallthru
        _
      %p141 = scmp.le.s32.totalorder 1, %s12
      %p142 = scmp.lt.s32.totalorder %s12, 3
      %p143 = pnand %p141, %p142
      %p144 = pneg %p143
      // Predicated region
      $region29: #{tpu_custom_call.1} parent=5 // pred_check
        _
      $region30: #{tpu_custom_call.1} parent=5 // pred_check_branch
        %146 = sbr.rel (%p143) target = $region32
      $region31: #{tpu_custom_call.1} parent=5 // pred_region
        %s147 = ssub.s32 %s12, 1
        %s148 = smul.u32 8, %s17
        %p149 = scmp.lt.s32.totalorder %s148, 15
        %s150 = scalar_select %p149, %s148, 15
        %s151 = smul.addr %s150, 2
        %s152 = smul.addr %s151, 8
        %s153 = scalar_lea.vmem %s0, %s152
        %p154 = pneg %p38
        %p155 = pneg %p35
        %p156 = pneg %p59
        %p157 = pneg %p56
        %p158 = pneg %p80
        %p159 = pneg %p77
        %p160 = pneg %p106
        %p161 = pneg %p103
        %s162 = sand.u32 %s93, 1
        %s163 = scalar_lea.sflag [#allocation3], %s162
        %s164 = sand.u32 %s93, 1
        %s165 = smul.addr %s164, 64
        %s166 = scalar_lea.vmem [#allocation2], %s165
        %s167 = smul.u32 8, %s17
        %p168 = scmp.lt.s32.totalorder %s167, 15
        %s169 = scalar_select %p168, %s167, 15
        %s170 = smul.addr %s169, 2
        %s171 = smul.addr %s170, 8
        %s172 = scalar_lea.vmem %s0, %s171
        %s173 = smul.u32 8, %s17
        %s174 = smul.u32 8, %s17
        %v175 = vld [vmem:[%s172] sm:$0xff]
        %v176 = vld [vmem:[%s172 + $0x8] sm:$0xff]
        %v177 = vld [vmem:[%s172 + $0x10] sm:$0xff]
        %v178 = vld [vmem:[%s172 + $0x18] sm:$0xff]
        %v179 = vld [vmem:[%s172 + $0x20] sm:$0xff]
        %v180 = vld [vmem:[%s172 + $0x28] sm:$0xff]
        %v181 = vld [vmem:[%s172 + $0x30] sm:$0xff]
        %v182 = vld [vmem:[%s172 + $0x38] sm:$0xff]
        %v183 = vld [vmem:[%s172 + $0x40] sm:$0xff]
        %v184 = vld [vmem:[%s172 + $0x48] sm:$0xff]
        %v185 = vld [vmem:[%s172 + $0x50] sm:$0xff]
        %v186 = vld [vmem:[%s172 + $0x58] sm:$0xff]
        %v187 = vld [vmem:[%s172 + $0x60] sm:$0xff]
        %v188 = vld [vmem:[%s172 + $0x68] sm:$0xff]
        %v189 = vld [vmem:[%s172 + $0x70] sm:$0xff]
        %v190 = vld [vmem:[%s172 + $0x78] sm:$0xff]
        %v191 = vld [vmem:[%s1] sm:$0xff]
        %v192 = vld [vmem:[%s1 + $0x8] sm:$0xff]
        %v193 = vld [vmem:[%s1 + $0x10] sm:$0xff]
        %v194 = vld [vmem:[%s1 + $0x18] sm:$0xff]
        %v195 = vld [vmem:[%s1 + $0x20] sm:$0xff]
        %v196 = vld [vmem:[%s1 + $0x28] sm:$0xff]
        %v197 = vld [vmem:[%s1 + $0x30] sm:$0xff]
        %v198 = vld [vmem:[%s1 + $0x38] sm:$0xff]
        %v199 = vld [vmem:[%s1 + $0x40] sm:$0xff]
        %v200 = vld [vmem:[%s1 + $0x48] sm:$0xff]
        %v201 = vld [vmem:[%s1 + $0x50] sm:$0xff]
        %v202 = vld [vmem:[%s1 + $0x58] sm:$0xff]
        %v203 = vld [vmem:[%s1 + $0x60] sm:$0xff]
        %v204 = vld [vmem:[%s1 + $0x68] sm:$0xff]
        %v205 = vld [vmem:[%s1 + $0x70] sm:$0xff]
        %v206 = vld [vmem:[%s1 + $0x78] sm:$0xff]
        %v207 = vld [vmem:[%s1 + $0x80] sm:$0xff]
        %v208 = vld [vmem:[%s1 + $0x88] sm:$0xff]
        %v209 = vld [vmem:[%s1 + $0x90] sm:$0xff]
        %v210 = vld [vmem:[%s1 + $0x98] sm:$0xff]
        %v211 = vld [vmem:[%s1 + $0xa0] sm:$0xff]
        %v212 = vld [vmem:[%s1 + $0xa8] sm:$0xff]
        %v213 = vld [vmem:[%s1 + $0xb0] sm:$0xff]
        %v214 = vld [vmem:[%s1 + $0xb8] sm:$0xff]
        %v215 = vld [vmem:[%s2] sm:$0x1]
        %v217 = vlaneseq
        %v218 = vshrl.u32 %v217, 7
        %v219 = vsub.s32 0, %v218
        %v220 = vrot.slane %v215, %v219
        %vm222 = vcmask 523264
        %v224 = vsel %vm222, %v176, 0
        %v227 = vsel %vm222, %v178, 0
        %v230 = vsel %vm222, %v180, 0
        %v233 = vsel %vm222, %v182, 0
        %v236 = vsel %vm222, %v184, 0
        %v239 = vsel %vm222, %v186, 0
        %v242 = vsel %vm222, %v188, 0
        %v245 = vsel %vm222, %v190, 0
        %247 = vmatprep.subr.mxu0 0.0
        %248 = vmatpush1.msra.mxu0 %v206
        %249 = vmatprep.subr.mxu0 0.0
        %250 = vmatpush1.msra.mxu0 %v205
        %251 = vmatprep.subr.mxu0 0.0
        %252 = vmatpush1.msra.mxu0 %v204
        %253 = vmatprep.subr.mxu0 0.0
        %254 = vmatpush1.msra.mxu0 %v203
        %255 = vmatprep.subr.mxu0 0.0
        %256 = vmatpush1.msra.mxu0 %v202
        %257 = vmatprep.subr.mxu0 0.0
        %258 = vmatpush1.msra.mxu0 %v201
        %259 = vmatprep.subr.mxu0 0.0
        %260 = vmatpush1.msra.mxu0 %v200
        %261 = vmatprep.subr.mxu0 0.0
        %262 = vmatpush1.msra.mxu0 %v199
        %263 = vmatprep.subr.mxu0 0.0
        %264 = vmatpush1.msra.mxu0 %v198
        %265 = vmatprep.subr.mxu0 0.0
        %266 = vmatpush1.msra.mxu0 %v197
        %267 = vmatprep.subr.mxu0 0.0
        %268 = vmatpush1.msra.mxu0 %v196
        %269 = vmatprep.subr.mxu0 0.0
        %270 = vmatpush1.msra.mxu0 %v195
        %271 = vmatprep.subr.mxu0 0.0
        %272 = vmatpush1.msra.mxu0 %v194
        %273 = vmatprep.subr.mxu0 0.0
        %274 = vmatpush1.msra.mxu0 %v193
        %275 = vmatprep.subr.mxu0 0.0
        %276 = vmatpush1.msra.mxu0 %v192
        %277 = vmatprep.subr.mxu0 0.0
        %278 = vmatpush1.msra.mxu0 %v191
        %279 = vmatprep.subr.mxu0 0.0
        %280 = vmatpush2.msra.mxu0 0.0
        %281 = vmatprep.subr.mxu0 0.0
        %282 = vmatpush2.msra.mxu0 0.0
        %283 = vmatprep.subr.mxu0 0.0
        %284 = vmatpush2.msra.mxu0 0.0
        %285 = vmatprep.subr.mxu0 0.0
        %286 = vmatpush2.msra.mxu0 0.0
        %287 = vmatprep.subr.mxu0 0.0
        %288 = vmatpush2.msra.mxu0 0.0
        %289 = vmatprep.subr.mxu0 0.0
        %290 = vmatpush2.msra.mxu0 0.0
        %291 = vmatprep.subr.mxu0 0.0
        %292 = vmatpush2.msra.mxu0 0.0
        %293 = vmatprep.subr.mxu0 0.0
        %294 = vmatpush2.msra.mxu0 0.0
        %295 = vmatprep.subr.mxu0 0.0
        %296 = vmatpush2.msra.mxu0 %v214
        %297 = vmatprep.subr.mxu0 0.0
        %298 = vmatpush2.msra.mxu0 %v213
        %299 = vmatprep.subr.mxu0 0.0
        %300 = vmatpush2.msra.mxu0 %v212
        %301 = vmatprep.subr.mxu0 0.0
        %302 = vmatpush2.msra.mxu0 %v211
        %303 = vmatprep.subr.mxu0 0.0
        %304 = vmatpush2.msra.mxu0 %v210
        %305 = vmatprep.subr.mxu0 0.0
        %306 = vmatpush2.msra.mxu0 %v209
        %307 = vmatprep.subr.mxu0 0.0
        %308 = vmatpush2.msra.mxu0 %v208
        %309 = vmatprep.subr.mxu0 0.0
        %310 = vmatpush2.msra.mxu0 %v207
        %311 = vmatprep.mubr.f32.mxu0 %v224
        %312 = vmatmul.mubr.f32.gmra.mxu0 %v175
        %v313 = vpop.f32.mrf.mxu0
        %v314 = vadd.f32 %v220, %v313
        %v315 = vpop.f32.mrf.mxu0
        %316 = vmatprep.mubr.f32.mxu0 %v227
        %317 = vmatmul.mubr.f32.gmra.mxu0 %v177
        %v318 = vpop.f32.mrf.mxu0
        %v319 = vadd.f32 %v220, %v318
        %v320 = vpop.f32.mrf.mxu0
        %321 = vmatprep.mubr.f32.mxu0 %v230
        %322 = vmatmul.mubr.f32.gmra.mxu0 %v179
        %v323 = vpop.f32.mrf.mxu0
        %v324 = vadd.f32 %v220, %v323
        %v325 = vpop.f32.mrf.mxu0
        %326 = vmatprep.mubr.f32.mxu0 %v233
        %327 = vmatmul.mubr.f32.gmra.mxu0 %v181
        %v328 = vpop.f32.mrf.mxu0
        %v329 = vadd.f32 %v220, %v328
        %v330 = vpop.f32.mrf.mxu0
        %331 = vmatprep.mubr.f32.mxu0 %v236
        %332 = vmatmul.mubr.f32.gmra.mxu0 %v183
        %v333 = vpop.f32.mrf.mxu0
        %v334 = vadd.f32 %v220, %v333
        %v335 = vpop.f32.mrf.mxu0
        %336 = vmatprep.mubr.f32.mxu0 %v239
        %337 = vmatmul.mubr.f32.gmra.mxu0 %v185
        %v338 = vpop.f32.mrf.mxu0
        %v339 = vadd.f32 %v220, %v338
        %v340 = vpop.f32.mrf.mxu0
        %341 = vmatprep.mubr.f32.mxu0 %v242
        %342 = vmatmul.mubr.f32.gmra.mxu0 %v187
        %v343 = vpop.f32.mrf.mxu0
        %v344 = vadd.f32 %v220, %v343
        %v345 = vpop.f32.mrf.mxu0
        %346 = vmatprep.mubr.f32.mxu0 %v245
        %347 = vmatmul.mubr.f32.gmra.mxu0 %v189
        %v348 = vpop.f32.mrf.mxu0
        %v349 = vadd.f32 %v220, %v348
        %v350 = vpop.f32.mrf.mxu0
        %351 = vdwg.mxu0
        %352 = vst [vmem:[%s166] sm:$0xff] %v314
        %353 = vst [vmem:[%s166 + $0x8] sm:$0xff] %v319
        %354 = vst [vmem:[%s166 + $0x10] sm:$0xff] %v324
        %355 = vst [vmem:[%s166 + $0x18] sm:$0xff] %v329
        %356 = vst [vmem:[%s166 + $0x20] sm:$0xff] %v334
        %357 = vst [vmem:[%s166 + $0x28] sm:$0xff] %v339
        %358 = vst [vmem:[%s166 + $0x30] sm:$0xff] %v344
        %359 = vst [vmem:[%s166 + $0x38] sm:$0xff] %v349
        %s360 = sand.u32 %s93, 1
        %s361 = scalar_lea.sflag [#allocation3], %s360
        %s362 = sand.u32 %s93, 1
        %s363 = smul.addr %s362, 64
        %s364 = scalar_lea.vmem [#allocation2], %s363
        // Predicated region
        $region33: #{tpu_custom_call.1} parent=31 // pred_check
          %p365 = pneg %p103
        $region34: #{tpu_custom_call.1} parent=31 // pred_check_branch
          %367 = sbr.rel (%p365) target = $region36
        $region35: #{tpu_custom_call.1} parent=31 // pred_region
          %s368 = smul.u32 8, %s17
          %s370 = ssub.s32 1024, 1024
          %371 = vsyncadd %s361, %s370
          %s372 = smul.addr %s368, 128
          %s373 = scalar_lea.hbm %s3, %s372
          %s374 = sshll.u32 %s364, 4
          %s375 = int_to_ptr.vmem [resolvable:$true] %s374
          %380 = dma.vmem_to_hbm [thread:$0]  %s375, 1024, %s373, %s361, 128, 128, 8
        $region36: #{tpu_custom_call.1} parent=31 // pred_fallthru
          _
      $region32: #{tpu_custom_call.1} parent=5 // pred_fallthru
        _
      %p381 = scmp.le.s32.totalorder 2, %s12
      // Predicated region
      $region37: #{tpu_custom_call.1} parent=5 // pred_check
        %p382 = pneg %p381
      $region38: #{tpu_custom_call.1} parent=5 // pred_check_branch
        %384 = sbr.rel (%p382) target = $region40
      $region39: #{tpu_custom_call.1} parent=5 // pred_region
        %s385 = ssub.s32 %s12, 2
        // Predicated region
        $region41: #{tpu_custom_call.1} parent=39 // pred_check
          %p386 = pneg %p109
        $region42: #{tpu_custom_call.1} parent=39 // pred_check_branch
          %388 = sbr.rel (%p386) target = $region44
        $region43: #{tpu_custom_call.1} parent=39 // pred_region
          %s389 = sand.u32 %s94, 1
          %s390 = scalar_lea.sflag [#allocation3], %s389
          %s391 = sand.u32 %s94, 1
          %s392 = smul.addr %s391, 64
          %s393 = scalar_lea.vmem [#allocation2], %s392
          %394 = dma.done %s390, 1024
        $region44: #{tpu_custom_call.1} parent=39 // pred_fallthru
          _
      $region40: #{tpu_custom_call.1} parent=5 // pred_fallthru
        _
    $region6: #{tpu_custom_call.1} parent=1 // loop_footer
      %s16 = sadd.s32 1, %s12
    $region7: #{tpu_custom_call.1} parent=1 // loop_footer_branch
      %11 = sbr.rel target = $region3
    $region8: #{tpu_custom_call.1} parent=1 // loop_exit
      _
    %395 = vsyncpa [#allocation3], 1
    %s396 = scalar_lea.sflag [#allocation3], 1
    %397 = vsyncpa %s396, 1

</llo_original>
